<compile_context>
chip_gen: v7x
topology: tpu7x:2x2x1
jax: 0.10.0
libtpu: 0.0.40
codegen_flags: <defaults>
</compile_context>

<pallas_src>
import jax
import jax.numpy as jnp
from jax import lax
from jax.experimental import pallas as pl
from jax.experimental.pallas import tpu as pltpu


# ----------------------------------------------------------------------------
# Kernel A: fused token head + GRU input-gate GEMM  (parallel over rows)
# ----------------------------------------------------------------------------
def head_gx_kernel(x_ref, wd_ref, bd_ref, wo_ref, wih_ref, bih_ref,
                   s_ref, gx_ref):
    x = x_ref[...]                                                   # (TM, H)
    t = jnp.tanh(
        jnp.dot(x, wd_ref[...], preferred_element_type=jnp.float32) + bd_ref[...]
    )                                                                # (TM, H)
    # token score (out_proj bias folded in the wrapper)
    s_ref[...] = jnp.dot(
        t, wo_ref[...], preferred_element_type=jnp.float32
    ).astype(s_ref.dtype)                                            # (TM, 1)
    # hoisted input-gate GEMM: gx = x @ W_ih^T + b_ih   (lane-dense 3H wide)
    gx_ref[...] = (
        jnp.dot(x, wih_ref[...], preferred_element_type=jnp.float32)
        + bih_ref[...]
    ).astype(gx_ref.dtype)                                           # (TM, 3H)


def token_head_and_gates(x_flat, wd_t, bd, wo_t, wih_t, bih, *, tm_max=256):
    n, h = x_flat.shape
    if n <= tm_max:
        tm, n_pad, x_in = n, n, x_flat
    else:
        tm = tm_max
        n_pad = ((n + tm - 1) // tm) * tm
        x_in = jnp.pad(x_flat, ((0, n_pad - n), (0, 0)))

    scores, gx = pl.pallas_call(
        head_gx_kernel,
        out_shape=(
            jax.ShapeDtypeStruct((n_pad, 1), jnp.float32),
            jax.ShapeDtypeStruct((n_pad, 3 * h), jnp.float32),
        ),
        grid=(n_pad // tm,),
        in_specs=[
            pl.BlockSpec((tm, h), lambda i: (i, 0)),
            pl.BlockSpec((h, h), lambda i: (0, 0)),
            pl.BlockSpec((1, h), lambda i: (0, 0)),
            pl.BlockSpec((h, 1), lambda i: (0, 0)),
            pl.BlockSpec((h, 3 * h), lambda i: (0, 0)),
            pl.BlockSpec((1, 3 * h), lambda i: (0, 0)),
        ],
        out_specs=[
            pl.BlockSpec((tm, 1), lambda i: (i, 0)),
            pl.BlockSpec((tm, 3 * h), lambda i: (i, 0)),
        ],
        compiler_params=pltpu.CompilerParams(
            dimension_semantics=("parallel",)),
    )(x_in, wd_t, bd, wo_t, wih_t, bih)

    return scores[:n], gx[:n]


# ----------------------------------------------------------------------------
# Kernel B: GRU recurrence, time axis chunked; h carried in the output block
# ----------------------------------------------------------------------------
def gru_kernel(gx_ref, whh_ref, bhh_ref, h_ref):
    hdim = whh_ref.shape[0]
    tc = gx_ref.shape[0]

    @pl.when(pl.program_id(0) == 0)
    def _():
        h_ref[...] = jnp.zeros_like(h_ref)

    def step(i, h):
        gx_t = gx_ref[i]                                             # (B, 3H)
        gh = (jnp.dot(h, whh_ref[...], preferred_element_type=jnp.float32)
              + bhh_ref[...])                                        # (B, 3H)
        r = jax.nn.sigmoid(gx_t[:, :hdim] + gh[:, :hdim])
        z = jax.nn.sigmoid(gx_t[:, hdim:2 * hdim] + gh[:, hdim:2 * hdim])
        n = jnp.tanh(gx_t[:, 2 * hdim:] + r * gh[:, 2 * hdim:])
        return (1.0 - z) * n + z * h

    h_ref[...] = lax.fori_loop(0, tc, step, h_ref[...], unroll=True)


def _pick_time_chunk(s, max_chunk=16):
    tc = 1
    for c in range(1, min(s, max_chunk) + 1):
        if s % c == 0:
            tc = c
    return tc


def gru_final_hidden(gx_tm, whh_t, bhh):
    s, b, h3 = gx_tm.shape
    h = h3 // 3
    tc = _pick_time_chunk(s)
    return pl.pallas_call(
        gru_kernel,
        out_shape=jax.ShapeDtypeStruct((b, h), jnp.float32),
        grid=(s // tc,),
        in_specs=[
            pl.BlockSpec((tc, b, 3 * h), lambda t: (t, 0, 0)),
            pl.BlockSpec((h, 3 * h), lambda t: (0, 0)),
            pl.BlockSpec((1, 3 * h), lambda t: (0, 0)),
        ],
        out_specs=pl.BlockSpec((b, h), lambda t: (0, 0)),
        compiler_params=pltpu.CompilerParams(
            dimension_semantics=("arbitrary",)),
    )(gx_tm, whh_t, bhh)


# ----------------------------------------------------------------------------
# Kernel C: func head on the final hidden state (runs once)
# ----------------------------------------------------------------------------
def func_head_kernel(h_ref, wfd_ref, bfd_ref, wfo_ref, bfo_ref, o_ref):
    f = jnp.tanh(
        jnp.dot(h_ref[...], wfd_ref[...], preferred_element_type=jnp.float32)
        + bfd_ref[...]
    )
    o_ref[...] = (
        jnp.dot(f, wfo_ref[...], preferred_element_type=jnp.float32)
        + bfo_ref[...]
    ).astype(o_ref.dtype)


def func_head(h_final, wfd_t, bfd, wfo_t, bfo):
    b, _ = h_final.shape
    return pl.pallas_call(
        func_head_kernel,
        out_shape=jax.ShapeDtypeStruct((b, 2), jnp.float32),
    )(h_final, wfd_t, bfd, wfo_t, bfo)


# ----------------------------------------------------------------------------
# Full forward
# ----------------------------------------------------------------------------
def classification_head_forward(hidden, params):
    b, s, h = hidden.shape
    n = b * s

    # Time-major flatten (row = t*B + b) so the GRU kernel can take whole
    # (B, 3H) time slices with a plain leading-axis index (no per-step
    # relayout); gx (3x larger than hidden) never needs a transpose.
    x_tm_flat = jnp.transpose(hidden, (1, 0, 2)).reshape(n, h)

    wd_t = params["dense_w"].T
    bd = params["dense_b"].reshape(1, h)
    wo_t = params["out_w"].T
    bo = params["out_b"]

    wih_t = params["gru_w_ih"].T                    # (H, 3H): [r | z | n]
    bih = params["gru_b_ih"].reshape(1, 3 * h)
    whh_t = params["gru_w_hh"].T                    # (H, 3H)
    bhh = params["gru_b_hh"].reshape(1, 3 * h)

    scores, gx = token_head_and_gates(x_tm_flat, wd_t, bd, wo_t, wih_t, bih)

    # token scores back to (B, S); fold the tiny out_proj bias here
    x = scores.reshape(s, b).T + bo                 # (B, S)

    h_final = gru_final_hidden(gx.reshape(s, b, 3 * h), whh_t, bhh)

    func_x = func_head(
        h_final,
        params["func_dense_w"].T, params["func_dense_b"].reshape(1, h),
        params["func_out_w"].T, params["func_out_b"].reshape(1, 2),
    )
    return x, func_x


# ----------------------------------------------------------------------------
# Pure-JAX reference (for correctness check)
# ----------------------------------------------------------------------------
def reference_forward(hidden, params):
    b, s, h = hidden.shape
    x = jnp.tanh(hidden @ params["dense_w"].T + params["dense_b"])
    x = x @ params["out_w"].T + params["out_b"]
    x = x.squeeze(-1)

    w_ih, w_hh, b_ih, b_hh = (
        params["gru_w_ih"], params["gru_w_hh"], params["gru_b_ih"], params["gru_b_hh"]
    )

    def step(h_prev, x_t):
        gx = x_t @ w_ih.T + b_ih
        gh = h_prev @ w_hh.T + b_hh
        r = jax.nn.sigmoid(gx[:, :h] + gh[:, :h])
        z = jax.nn.sigmoid(gx[:, h:2 * h] + gh[:, h:2 * h])
        n = jnp.tanh(gx[:, 2 * h:] + r * gh[:, 2 * h:])
        return (1.0 - z) * n + z * h_prev, None

    h_fin, _ = jax.lax.scan(step, jnp.zeros((b, h), jnp.float32),
                            jnp.transpose(hidden, (1, 0, 2)))
    f = jnp.tanh(h_fin @ params["func_dense_w"].T + params["func_dense_b"])
    f = f @ params["func_out_w"].T + params["func_out_b"]
    return x, f


# ----------------------------------------------------------------------------
def make_params(key, h):
    ks = jax.random.split(key, 12)
    norm = lambda k, shape: (0.1 * jax.random.normal(k, shape)).astype(jnp.float32)
    return {
        "dense_w": norm(ks[0], (h, h)),
        "dense_b": norm(ks[1], (h,)),
        "out_w": norm(ks[2], (1, h)),
        "out_b": norm(ks[3], (1,)),
        "gru_w_ih": norm(ks[4], (3 * h, h)),
        "gru_w_hh": norm(ks[5], (3 * h, h)),
        "gru_b_ih": norm(ks[6], (3 * h,)),
        "gru_b_hh": norm(ks[7], (3 * h,)),
        "func_dense_w": norm(ks[8], (h, h)),
        "func_dense_b": norm(ks[9], (h,)),
        "func_out_w": norm(ks[10], (2, h)),
        "func_out_b": norm(ks[11], (2,)),
    }


if __name__ == "__main__":
    B, S, H = 2, 8, 32                      # small stand-in for (B, S, 768)
    key = jax.random.PRNGKey(0)
    k_x, k_p = jax.random.split(key)
    hidden = jax.random.normal(k_x, (B, S, H), dtype=jnp.float32)
    params = make_params(k_p, H)

    x_out, func_out = jax.block_until_ready(
        classification_head_forward(hidden, params)
    )
    x_ref, func_ref = reference_forward(hidden, params)

    assert x_out.shape == (B, S) and func_out.shape == (B, 2)
    assert jnp.allclose(x_out, x_ref, atol=1e-5, rtol=1e-5)
    assert jnp.allclose(func_out, func_ref, atol=1e-5, rtol=1e-5)
    print("KERNEL_OK")
</pallas_src>

<mosaic_0001>
module attributes {stable_mosaic.version = 11 : i64} {
  func.func @head_gx_kernel(%arg0: i32, %arg1: memref<16x32xf32, #tpu.memory_space<vmem>>, %arg2: memref<32x32xf32, #tpu.memory_space<vmem>>, %arg3: memref<1x32xf32, #tpu.memory_space<vmem>>, %arg4: memref<32x1xf32, #tpu.memory_space<vmem>>, %arg5: memref<32x96xf32, #tpu.memory_space<vmem>>, %arg6: memref<1x96xf32, #tpu.memory_space<vmem>>, %arg7: memref<16x1xf32, #tpu.memory_space<vmem>>, %arg8: memref<16x96xf32, #tpu.memory_space<vmem>>) attributes {dimension_semantics = [#tpu.dimension_semantics<parallel>], iteration_bounds = array<i64: 1>, scalar_prefetch = 0 : i64, scratch_operands = 0 : i64, tpu.core_type = #tpu.core_type<tc>, window_params = [{transform_indices = @transform_0, window_bounds = array<i64: 16, 32>}, {pipeline_mode = #tpu.pipeline_mode<synchronous>, transform_indices = @transform_1, window_bounds = array<i64: 32, 32>}, {pipeline_mode = #tpu.pipeline_mode<synchronous>, transform_indices = @transform_2, window_bounds = array<i64: 1, 32>}, {pipeline_mode = #tpu.pipeline_mode<synchronous>, transform_indices = @transform_3, window_bounds = array<i64: 32, 1>}, {pipeline_mode = #tpu.pipeline_mode<synchronous>, transform_indices = @transform_4, window_bounds = array<i64: 32, 96>}, {pipeline_mode = #tpu.pipeline_mode<synchronous>, transform_indices = @transform_5, window_bounds = array<i64: 1, 96>}, {transform_indices = @transform_6, window_bounds = array<i64: 16, 1>}, {transform_indices = @transform_7, window_bounds = array<i64: 16, 96>}]} {
    %c0 = arith.constant 0 : index
    %c0_0 = arith.constant 0 : index
    %0 = vector.load %arg1[%c0, %c0_0] : memref<16x32xf32, #tpu.memory_space<vmem>>, vector<16x32xf32>
    %c0_1 = arith.constant 0 : index
    %c0_2 = arith.constant 0 : index
    %1 = vector.load %arg2[%c0_1, %c0_2] : memref<32x32xf32, #tpu.memory_space<vmem>>, vector<32x32xf32>
    %cst = arith.constant dense<0.000000e+00> : vector<16x32xf32>
    %2 = tpu.matmul %0, %1, %cst {dimension_numbers = #tpu.dot_dimension_numbers<[1], [0], [0], [1], [0, 0, 1, 1], [], []>} : vector<16x32xf32>, vector<32x32xf32>, vector<16x32xf32> -> vector<16x32xf32>
    %c0_3 = arith.constant 0 : index
    %c0_4 = arith.constant 0 : index
    %3 = vector.load %arg3[%c0_3, %c0_4] : memref<1x32xf32, #tpu.memory_space<vmem>>, vector<1x32xf32>
    %4 = vector.broadcast %3 : vector<1x32xf32> to vector<16x32xf32>
    %5 = arith.addf %2, %4 : vector<16x32xf32>
    %6 = math.tanh %5 : vector<16x32xf32>
    %c0_5 = arith.constant 0 : index
    %c0_6 = arith.constant 0 : index
    %7 = vector.load %arg4[%c0_5, %c0_6] : memref<32x1xf32, #tpu.memory_space<vmem>>, vector<32x1xf32>
    %cst_7 = arith.constant dense<0.000000e+00> : vector<16x1xf32>
    %8 = tpu.matmul %6, %7, %cst_7 {dimension_numbers = #tpu.dot_dimension_numbers<[1], [0], [0], [1], [0, 0, 1, 1], [], []>} : vector<16x32xf32>, vector<32x1xf32>, vector<16x1xf32> -> vector<16x1xf32>
    %c0_8 = arith.constant 0 : index
    %c0_9 = arith.constant 0 : index
    %9 = vector.load %arg7[%c0_8, %c0_9] : memref<16x1xf32, #tpu.memory_space<vmem>>, vector<16x1xf32>
    tpu.vector_store %arg7[%c0_8, %c0_9], %8 {strides = array<i32>} : memref<16x1xf32, #tpu.memory_space<vmem>>, vector<16x1xf32>,
    %c0_10 = arith.constant 0 : index
    %c0_11 = arith.constant 0 : index
    %10 = vector.load %arg5[%c0_10, %c0_11] : memref<32x96xf32, #tpu.memory_space<vmem>>, vector<32x96xf32>
    %cst_12 = arith.constant dense<0.000000e+00> : vector<16x96xf32>
    %11 = tpu.matmul %0, %10, %cst_12 {dimension_numbers = #tpu.dot_dimension_numbers<[1], [0], [0], [1], [0, 0, 1, 1], [], []>} : vector<16x32xf32>, vector<32x96xf32>, vector<16x96xf32> -> vector<16x96xf32>
    %c0_13 = arith.constant 0 : index
    %c0_14 = arith.constant 0 : index
    %12 = vector.load %arg6[%c0_13, %c0_14] : memref<1x96xf32, #tpu.memory_space<vmem>>, vector<1x96xf32>
    %13 = vector.broadcast %12 : vector<1x96xf32> to vector<16x96xf32>
    %14 = arith.addf %11, %13 : vector<16x96xf32>
    %c0_15 = arith.constant 0 : index
    %c0_16 = arith.constant 0 : index
    %15 = vector.load %arg8[%c0_15, %c0_16] : memref<16x96xf32, #tpu.memory_space<vmem>>, vector<16x96xf32>
    tpu.vector_store %arg8[%c0_15, %c0_16], %14 {strides = array<i32>} : memref<16x96xf32, #tpu.memory_space<vmem>>, vector<16x96xf32>,
    return
  }
  func.func @transform_0(%arg0: i32) -> (i32, i32) {
    %c0_i32 = arith.constant 0 : i32
    %c0_i32_0 = arith.constant 0 : i32
    return %arg0, %c0_i32 : i32, i32
  }
  func.func @transform_1(%arg0: i32) -> (i32, i32) {
    %c0_i32 = arith.constant 0 : i32
    %c0_i32_0 = arith.constant 0 : i32
    %c0_i32_1 = arith.constant 0 : i32
    return %c0_i32, %c0_i32_0 : i32, i32
  }
  func.func @transform_2(%arg0: i32) -> (i32, i32) {
    %c0_i32 = arith.constant 0 : i32
    %c0_i32_0 = arith.constant 0 : i32
    %c0_i32_1 = arith.constant 0 : i32
    return %c0_i32, %c0_i32_0 : i32, i32
  }
  func.func @transform_3(%arg0: i32) -> (i32, i32) {
    %c0_i32 = arith.constant 0 : i32
    %c0_i32_0 = arith.constant 0 : i32
    %c0_i32_1 = arith.constant 0 : i32
    return %c0_i32, %c0_i32_0 : i32, i32
  }
  func.func @transform_4(%arg0: i32) -> (i32, i32) {
    %c0_i32 = arith.constant 0 : i32
    %c0_i32_0 = arith.constant 0 : i32
    %c0_i32_1 = arith.constant 0 : i32
    return %c0_i32, %c0_i32_0 : i32, i32
  }
  func.func @transform_5(%arg0: i32) -> (i32, i32) {
    %c0_i32 = arith.constant 0 : i32
    %c0_i32_0 = arith.constant 0 : i32
    %c0_i32_1 = arith.constant 0 : i32
    return %c0_i32, %c0_i32_0 : i32, i32
  }
  func.func @transform_6(%arg0: i32) -> (i32, i32) {
    %c0_i32 = arith.constant 0 : i32
    %c0_i32_0 = arith.constant 0 : i32
    return %arg0, %c0_i32 : i32, i32
  }
  func.func @transform_7(%arg0: i32) -> (i32, i32) {
    %c0_i32 = arith.constant 0 : i32
    %c0_i32_0 = arith.constant 0 : i32
    return %arg0, %c0_i32 : i32, i32
  }
}

</mosaic_0001>

<llo_original>
// kernel: tpu_custom_call.1
$region0: #{tpu_custom_call.1}
  #allocation0 [shape = 'u32[]', space=smem, size = 0x4, offset = 0x4, fixed_abs, tag = 'smem constant byte address 0x4 - core index']
  #allocation1 [shape = 'u32[144,128]{1,0:T(1,128)}', space=vmem, size = 0x12000, scoped, tag = 'internal scratch']
  %s0 = inlined_call_operand.hbm [shape: f32[16,32], index: 0, kind: input, shape index: {}]
  %s1 = inlined_call_operand.vmem [shape: f32[32,32], index: 1, kind: input, shape index: {}]
  %s2 = inlined_call_operand.vmem [shape: f32[1,32], index: 2, kind: input, shape index: {}]
  %s3 = inlined_call_operand.vmem [shape: f32[32,1], index: 3, kind: input, shape index: {}]
  %s4 = inlined_call_operand.hbm [shape: f32[32,96], index: 4, kind: input, shape index: {}]
  %s5 = inlined_call_operand.vmem [shape: f32[1,96], index: 5, kind: input, shape index: {}]
  %s6 = inlined_call_operand.vmem [shape: f32[16,1], index: 6, kind: output, shape index: {0}]
  %s7 = inlined_call_operand.hbm [shape: f32[16,96], index: 7, kind: output, shape index: {1}]
  %8 = xla_tuple %s6, %s7
  %s9 = sld [smem:[#allocation0]]
  $region50: #{tpu_custom_call.1} parent=0
    _
  %s11 = ssub.s32 1, %s9
  %s12 = scalar_select 0, %s11, %s9
  $region1: #{tpu_custom_call.1} parent=0
    #allocation2 [shape = 'u8[8192]{0}', space=vmem, size = 0x2000, scoped, tag = 'input window, operand 0, single buffered']
    #allocation3 [shape = 's32[1]{0}', space=sflag, size = 0x4, scoped, tag = 'scoped memory for tpu_custom_call.1']
    #allocation4 [shape = 's32[1]{0}', space=sflag, size = 0x4, scoped, tag = 'scoped memory for tpu_custom_call.1']
    #allocation5 [shape = 'u8[16384]{0}', space=vmem, size = 0x4000, scoped, tag = 'input window, operand 4, single buffered']
    #allocation6 [shape = 's32[1]{0}', space=sflag, size = 0x4, scoped, tag = 'scoped memory for tpu_custom_call.1']
    #allocation7 [shape = 'u8[8192]{0}', space=vmem, size = 0x2000, scoped, tag = 'output window, operand 1, single buffered']
    %13 = vsyncpa [#allocation3], 0
    %14 = vsyncpa [#allocation6], 0
    %15 = vsyncpa [#allocation4], 0
    // Predicated region
    $region2: #{tpu_custom_call.1} parent=1 // pred_check
      _
    $region3: #{tpu_custom_call.1} parent=1 // pred_check_branch
      %17 = sbr.rel (0) target = $region5
    $region4: #{tpu_custom_call.1} parent=1 // pred_region
      %s19 = ssub.s32 256, 256
      %20 = vsyncadd [#allocation3], %s19
      %s21 = sshll.u32 [#allocation2], 4
      %s22 = int_to_ptr.vmem [resolvable:$true] %s21
      %27 = dma.hbm_to_vmem [thread:$0]  %s0, 256, %s22, [#allocation3], 128, 128, 8
    $region5: #{tpu_custom_call.1} parent=1 // pred_fallthru
      _
    // Predicated region
    $region6: #{tpu_custom_call.1} parent=1 // pred_check
      _
    $region7: #{tpu_custom_call.1} parent=1 // pred_check_branch
      %29 = sbr.rel (0) target = $region9
    $region8: #{tpu_custom_call.1} parent=1 // pred_region
      _
    $region9: #{tpu_custom_call.1} parent=1 // pred_fallthru
      _
    // Predicated region
    $region10: #{tpu_custom_call.1} parent=1 // pred_check
      _
    $region11: #{tpu_custom_call.1} parent=1 // pred_check_branch
      %31 = sbr.rel (0) target = $region13
    $region12: #{tpu_custom_call.1} parent=1 // pred_region
      _
    $region13: #{tpu_custom_call.1} parent=1 // pred_fallthru
      _
    // Predicated region
    $region14: #{tpu_custom_call.1} parent=1 // pred_check
      _
    $region15: #{tpu_custom_call.1} parent=1 // pred_check_branch
      %33 = sbr.rel (0) target = $region17
    $region16: #{tpu_custom_call.1} parent=1 // pred_region
      _
    $region17: #{tpu_custom_call.1} parent=1 // pred_fallthru
      _
    // Predicated region
    $region18: #{tpu_custom_call.1} parent=1 // pred_check
      _
    $region19: #{tpu_custom_call.1} parent=1 // pred_check_branch
      %35 = sbr.rel (0) target = $region21
    $region20: #{tpu_custom_call.1} parent=1 // pred_region
      %s37 = ssub.s32 512, 512
      %38 = vsyncadd [#allocation6], %s37
      %s39 = sshll.u32 [#allocation5], 4
      %s40 = int_to_ptr.vmem [resolvable:$true] %s39
      %45 = dma.hbm_to_vmem [thread:$0]  %s4, 512, %s40, [#allocation6], 128, 128, 8
    $region21: #{tpu_custom_call.1} parent=1 // pred_fallthru
      _
    // Predicated region
    $region22: #{tpu_custom_call.1} parent=1 // pred_check
      _
    $region23: #{tpu_custom_call.1} parent=1 // pred_check_branch
      %47 = sbr.rel (0) target = $region25
    $region24: #{tpu_custom_call.1} parent=1 // pred_region
      _
    $region25: #{tpu_custom_call.1} parent=1 // pred_fallthru
      _
    // Predicated region
    $region26: #{tpu_custom_call.1} parent=1 // pred_check
      _
    $region27: #{tpu_custom_call.1} parent=1 // pred_check_branch
      %49 = sbr.rel (0) target = $region29
    $region28: #{tpu_custom_call.1} parent=1 // pred_region
      %50 = dma.done [#allocation3], 256
    $region29: #{tpu_custom_call.1} parent=1 // pred_fallthru
      _
    // Predicated region
    $region30: #{tpu_custom_call.1} parent=1 // pred_check
      _
    $region31: #{tpu_custom_call.1} parent=1 // pred_check_branch
      %52 = sbr.rel (0) target = $region33
    $region32: #{tpu_custom_call.1} parent=1 // pred_region
      %53 = dma.done [#allocation6], 512
    $region33: #{tpu_custom_call.1} parent=1 // pred_fallthru
      _
    %v54 = vld [vmem:[#allocation2] sm:$0xff]
    %v55 = vld [vmem:[#allocation2 + $0x8] sm:$0xff]
    %v56 = vld [vmem:[%s1] sm:$0xff]
    %v57 = vld [vmem:[%s1 + $0x8] sm:$0xff]
    %v58 = vld [vmem:[%s1 + $0x10] sm:$0xff]
    %v59 = vld [vmem:[%s1 + $0x18] sm:$0xff]
    %v60 = vld [vmem:[%s2] sm:$0x1]
    %v62 = vlaneseq
    %v63 = vshrl.u32 %v62, 7
    %v64 = vsub.s32 0, %v63
    %v65 = vrot.slane %v60, %v64
    %vm67 = vcmask 261120
    %v69 = vsel %vm67, %v54, 0
    %v72 = vsel %vm67, %v55, 0
    %74 = vmatprep.subr.mxu0 0.0
    %75 = vmatpush1.msra.mxu0 %v56
    %76 = vmatprep.subr.mxu0 0.0
    %77 = vmatpush1.msra.mxu0 %v57
    %78 = vmatprep.subr.mxu0 0.0
    %79 = vmatpush1.msra.mxu0 %v58
    %80 = vmatprep.subr.mxu0 0.0
    %81 = vmatpush1.msra.mxu0 %v59
    %82 = vmatprep.subr.mxu0 0.0
    %83 = vmatpush1.msra.mxu0 0.0
    %84 = vmatprep.subr.mxu0 0.0
    %85 = vmatpush1.msra.mxu0 0.0
    %86 = vmatprep.subr.mxu0 0.0
    %87 = vmatpush1.msra.mxu0 0.0
    %88 = vmatprep.subr.mxu0 0.0
    %89 = vmatpush1.msra.mxu0 0.0
    %90 = vmatprep.subr.mxu0 0.0
    %91 = vmatpush1.msra.mxu0 0.0
    %92 = vmatprep.subr.mxu0 0.0
    %93 = vmatpush1.msra.mxu0 0.0
    %94 = vmatprep.subr.mxu0 0.0
    %95 = vmatpush1.msra.mxu0 0.0
    %96 = vmatprep.subr.mxu0 0.0
    %97 = vmatpush1.msra.mxu0 0.0
    %98 = vmatprep.subr.mxu0 0.0
    %99 = vmatpush1.msra.mxu0 0.0
    %100 = vmatprep.subr.mxu0 0.0
    %101 = vmatpush1.msra.mxu0 0.0
    %102 = vmatprep.subr.mxu0 0.0
    %103 = vmatpush1.msra.mxu0 0.0
    %104 = vmatprep.subr.mxu0 0.0
    %105 = vmatpush1.msra.mxu0 0.0
    %106 = vmatprep.subr.mxu0 0.0
    %107 = vmatpush1.msra.mxu0 0.0
    %108 = vmatprep.subr.mxu0 0.0
    %109 = vmatpush1.msra.mxu0 0.0
    %110 = vmatprep.subr.mxu0 0.0
    %111 = vmatpush1.msra.mxu0 0.0
    %112 = vmatprep.subr.mxu0 0.0
    %113 = vmatpush1.msra.mxu0 0.0
    %114 = vmatprep.subr.mxu0 0.0
    %115 = vmatpush1.msra.mxu0 0.0
    %116 = vmatprep.subr.mxu0 0.0
    %117 = vmatpush1.msra.mxu0 0.0
    %118 = vmatprep.subr.mxu0 0.0
    %119 = vmatpush1.msra.mxu0 0.0
    %120 = vmatprep.subr.mxu0 0.0
    %121 = vmatpush1.msra.mxu0 0.0
    %122 = vmatprep.subr.mxu0 0.0
    %123 = vmatpush1.msra.mxu0 0.0
    %124 = vmatprep.subr.mxu0 0.0
    %125 = vmatpush1.msra.mxu0 0.0
    %126 = vmatprep.subr.mxu0 0.0
    %127 = vmatpush1.msra.mxu0 0.0
    %128 = vmatprep.subr.mxu0 0.0
    %129 = vmatpush1.msra.mxu0 0.0
    %130 = vmatprep.subr.mxu0 0.0
    %131 = vmatpush1.msra.mxu0 0.0
    %132 = vmatprep.subr.mxu0 0.0
    %133 = vmatpush1.msra.mxu0 0.0
    %134 = vmatprep.subr.mxu0 0.0
    %135 = vmatpush1.msra.mxu0 0.0
    %136 = vmatprep.subr.mxu0 0.0
    %137 = vmatpush1.msra.mxu0 0.0
    %138 = vmatprep.mubr.f32.mxu0 0.0
    %139 = vmatmul.mubr.f32.gmra.mrb[0].mxu0 %v69
    %v140 = vpop.f32.mrb[0].mxu0
    %v141 = vadd.f32 %v65, %v140
    %v142 = vpop.f32.mrb[0].mxu0
    %143 = vmatprep.mubr.f32.mxu0 0.0
    %144 = vmatmul.mubr.f32.gmra.mrb[0].mxu0 %v72
    %v145 = vpop.f32.mrb[0].mxu0
    %v146 = vadd.f32 %v65, %v145
    %v147 = vpop.f32.mrb[0].mxu0
    %148 = vdwg.mxu0
    %v149 = vtanh.pop %v141
    %v150 = vtanh.pop %v146
    %v151 = vld [vmem:[%s3] sm:$0xff]
    %v152 = vld [vmem:[%s3 + $0x8] sm:$0xff]
    %v153 = vld [vmem:[%s3 + $0x10] sm:$0xff]
    %v154 = vld [vmem:[%s3 + $0x18] sm:$0xff]
    %v156 = vsel %vm67, %v149, 0
    %v159 = vsel %vm67, %v150, 0
    %161 = vmatprep.subr.mxu0 0.0
    %162 = vmatpush1.msra.mxu0 %v151
    %163 = vmatprep.subr.mxu0 0.0
    %164 = vmatpush1.msra.mxu0 %v152
    %165 = vmatprep.subr.mxu0 0.0
    %166 = vmatpush1.msra.mxu0 %v153
    %167 = vmatprep.subr.mxu0 0.0
    %168 = vmatpush1.msra.mxu0 %v154
    %169 = vmatprep.subr.mxu0 0.0
    %170 = vmatpush1.msra.mxu0 0.0
    %171 = vmatprep.subr.mxu0 0.0
    %172 = vmatpush1.msra.mxu0 0.0
    %173 = vmatprep.subr.mxu0 0.0
    %174 = vmatpush1.msra.mxu0 0.0
    %175 = vmatprep.subr.mxu0 0.0
    %176 = vmatpush1.msra.mxu0 0.0
    %177 = vmatprep.subr.mxu0 0.0
    %178 = vmatpush1.msra.mxu0 0.0
    %179 = vmatprep.subr.mxu0 0.0
    %180 = vmatpush1.msra.mxu0 0.0
    %181 = vmatprep.subr.mxu0 0.0
    %182 = vmatpush1.msra.mxu0 0.0
    %183 = vmatprep.subr.mxu0 0.0
    %184 = vmatpush1.msra.mxu0 0.0
    %185 = vmatprep.subr.mxu0 0.0
    %186 = vmatpush1.msra.mxu0 0.0
    %187 = vmatprep.subr.mxu0 0.0
    %188 = vmatpush1.msra.mxu0 0.0
    %189 = vmatprep.subr.mxu0 0.0
    %190 = vmatpush1.msra.mxu0 0.0
    %191 = vmatprep.subr.mxu0 0.0
    %192 = vmatpush1.msra.mxu0 0.0
    %193 = vmatprep.subr.mxu0 0.0
    %194 = vmatpush1.msra.mxu0 0.0
    %195 = vmatprep.subr.mxu0 0.0
    %196 = vmatpush1.msra.mxu0 0.0
    %197 = vmatprep.subr.mxu0 0.0
    %198 = vmatpush1.msra.mxu0 0.0
    %199 = vmatprep.subr.mxu0 0.0
    %200 = vmatpush1.msra.mxu0 0.0
    %201 = vmatprep.subr.mxu0 0.0
    %202 = vmatpush1.msra.mxu0 0.0
    %203 = vmatprep.subr.mxu0 0.0
    %204 = vmatpush1.msra.mxu0 0.0
    %205 = vmatprep.subr.mxu0 0.0
    %206 = vmatpush1.msra.mxu0 0.0
    %207 = vmatprep.subr.mxu0 0.0
    %208 = vmatpush1.msra.mxu0 0.0
    %209 = vmatprep.subr.mxu0 0.0
    %210 = vmatpush1.msra.mxu0 0.0
    %211 = vmatprep.subr.mxu0 0.0
    %212 = vmatpush1.msra.mxu0 0.0
    %213 = vmatprep.subr.mxu0 0.0
    %214 = vmatpush1.msra.mxu0 0.0
    %215 = vmatprep.subr.mxu0 0.0
    %216 = vmatpush1.msra.mxu0 0.0
    %217 = vmatprep.subr.mxu0 0.0
    %218 = vmatpush1.msra.mxu0 0.0
    %219 = vmatprep.subr.mxu0 0.0
    %220 = vmatpush1.msra.mxu0 0.0
    %221 = vmatprep.subr.mxu0 0.0
    %222 = vmatpush1.msra.mxu0 0.0
    %223 = vmatprep.subr.mxu0 0.0
    %224 = vmatpush1.msra.mxu0 0.0
    %225 = vmatprep.mubr.f32.mxu0 0.0
    %226 = vmatmul.mubr.f32.gmra.mrb[0].mxu0 %v156
    %v227 = vpop.f32.mrb[0].mxu0
    %v228 = vadd.f32 0.0, %v227
    %v229 = vpop.f32.mrb[0].mxu0
    %230 = vmatprep.mubr.f32.mxu0 0.0
    %231 = vmatmul.mubr.f32.gmra.mrb[0].mxu0 %v159
    %v232 = vpop.f32.mrb[0].mxu0
    %v233 = vadd.f32 0.0, %v232
    %v234 = vpop.f32.mrb[0].mxu0
    %235 = vdwg.mxu0
    %vm236 = vcmask 7168
    %237 = vst.msk [vmem:[%s6] sm:$0xff] %vm236, %v228
    %238 = vst.msk [vmem:[%s6 + $0x8] sm:$0xff] %vm236, %v233
    %v239 = vld [vmem:[#allocation5] sm:$0xff]
    %v240 = vld [vmem:[#allocation5 + $0x8] sm:$0xff]
    %v241 = vld [vmem:[#allocation5 + $0x10] sm:$0xff]
    %v242 = vld [vmem:[#allocation5 + $0x18] sm:$0xff]
    %v243 = vld [vmem:[%s5] sm:$0x1]
    %v245 = vlaneseq
    %v246 = vshrl.u32 %v245, 7
    %v247 = vsub.s32 0, %v246
    %v248 = vrot.slane %v243, %v247
    %250 = vmatprep.subr.mxu0 0.0
    %251 = vmatpush1.msra.mxu0 %v239
    %252 = vmatprep.subr.mxu0 0.0
    %253 = vmatpush1.msra.mxu0 %v240
    %254 = vmatprep.subr.mxu0 0.0
    %255 = vmatpush1.msra.mxu0 %v241
    %256 = vmatprep.subr.mxu0 0.0
    %257 = vmatpush1.msra.mxu0 %v242
    %258 = vmatprep.subr.mxu0 0.0
    %259 = vmatpush1.msra.mxu0 0.0
    %260 = vmatprep.subr.mxu0 0.0
    %261 = vmatpush1.msra.mxu0 0.0
    %262 = vmatprep.subr.mxu0 0.0
    %263 = vmatpush1.msra.mxu0 0.0
    %264 = vmatprep.subr.mxu0 0.0
    %265 = vmatpush1.msra.mxu0 0.0
    %266 = vmatprep.subr.mxu0 0.0
    %267 = vmatpush1.msra.mxu0 0.0
    %268 = vmatprep.subr.mxu0 0.0
    %269 = vmatpush1.msra.mxu0 0.0
    %270 = vmatprep.subr.mxu0 0.0
    %271 = vmatpush1.msra.mxu0 0.0
    %272 = vmatprep.subr.mxu0 0.0
    %273 = vmatpush1.msra.mxu0 0.0
    %274 = vmatprep.subr.mxu0 0.0
    %275 = vmatpush1.msra.mxu0 0.0
    %276 = vmatprep.subr.mxu0 0.0
    %277 = vmatpush1.msra.mxu0 0.0
    %278 = vmatprep.subr.mxu0 0.0
    %279 = vmatpush1.msra.mxu0 0.0
    %280 = vmatprep.subr.mxu0 0.0
    %281 = vmatpush1.msra.mxu0 0.0
    %282 = vmatprep.subr.mxu0 0.0
    %283 = vmatpush1.msra.mxu0 0.0
    %284 = vmatprep.subr.mxu0 0.0
    %285 = vmatpush1.msra.mxu0 0.0
    %286 = vmatprep.subr.mxu0 0.0
    %287 = vmatpush1.msra.mxu0 0.0
    %288 = vmatprep.subr.mxu0 0.0
    %289 = vmatpush1.msra.mxu0 0.0
    %290 = vmatprep.subr.mxu0 0.0
    %291 = vmatpush1.msra.mxu0 0.0
    %292 = vmatprep.subr.mxu0 0.0
    %293 = vmatpush1.msra.mxu0 0.0
    %294 = vmatprep.subr.mxu0 0.0
    %295 = vmatpush1.msra.mxu0 0.0
    %296 = vmatprep.subr.mxu0 0.0
    %297 = vmatpush1.msra.mxu0 0.0
    %298 = vmatprep.subr.mxu0 0.0
    %299 = vmatpush1.msra.mxu0 0.0
    %300 = vmatprep.subr.mxu0 0.0
    %301 = vmatpush1.msra.mxu0 0.0
    %302 = vmatprep.subr.mxu0 0.0
    %303 = vmatpush1.msra.mxu0 0.0
    %304 = vmatprep.subr.mxu0 0.0
    %305 = vmatpush1.msra.mxu0 0.0
    %306 = vmatprep.subr.mxu0 0.0
    %307 = vmatpush1.msra.mxu0 0.0
    %308 = vmatprep.subr.mxu0 0.0
    %309 = vmatpush1.msra.mxu0 0.0
    %310 = vmatprep.subr.mxu0 0.0
    %311 = vmatpush1.msra.mxu0 0.0
    %312 = vmatprep.subr.mxu0 0.0
    %313 = vmatpush1.msra.mxu0 0.0
    %314 = vmatprep.mubr.f32.mxu0 0.0
    %315 = vmatmul.mubr.f32.gmra.mrb[0].mxu0 %v69
    %v316 = vpop.f32.mrb[0].mxu0
    %v317 = vadd.f32 %v248, %v316
    %v318 = vpop.f32.mrb[0].mxu0
    %319 = vmatprep.mubr.f32.mxu0 0.0
    %320 = vmatmul.mubr.f32.gmra.mrb[0].mxu0 %v72
    %v321 = vpop.f32.mrb[0].mxu0
    %v322 = vadd.f32 %v248, %v321
    %v323 = vpop.f32.mrb[0].mxu0
    %324 = vdwg.mxu0
    %vm325 = vcmask 785408
    %326 = vst.msk [vmem:[#allocation7] sm:$0xff] %vm325, %v317
    %327 = vst.msk [vmem:[#allocation7 + $0x8] sm:$0xff] %vm325, %v322
    // Predicated region
    $region34: #{tpu_custom_call.1} parent=1 // pred_check
      _
    $region35: #{tpu_custom_call.1} parent=1 // pred_check_branch
      %329 = sbr.rel (0) target = $region37
    $region36: #{tpu_custom_call.1} parent=1 // pred_region
      _
    $region37: #{tpu_custom_call.1} parent=1 // pred_fallthru
      _
    // Predicated region
    $region38: #{tpu_custom_call.1} parent=1 // pred_check
      _
    $region39: #{tpu_custom_call.1} parent=1 // pred_check_branch
      %331 = sbr.rel (0) target = $region41
    $region40: #{tpu_custom_call.1} parent=1 // pred_region
      %s333 = ssub.s32 256, 256
      %334 = vsyncadd [#allocation4], %s333
      %s335 = sshll.u32 [#allocation7], 4
      %s336 = int_to_ptr.vmem [resolvable:$true] %s335
      %341 = dma.vmem_to_hbm [thread:$0]  %s336, 256, %s7, [#allocation4], 128, 128, 8
    $region41: #{tpu_custom_call.1} parent=1 // pred_fallthru
      _
    // Predicated region
    $region42: #{tpu_custom_call.1} parent=1 // pred_check
      _
    $region43: #{tpu_custom_call.1} parent=1 // pred_check_branch
      %343 = sbr.rel (0) target = $region45
    $region44: #{tpu_custom_call.1} parent=1 // pred_region
      _
    $region45: #{tpu_custom_call.1} parent=1 // pred_fallthru
      _
    // Predicated region
    $region46: #{tpu_custom_call.1} parent=1 // pred_check
      _
    $region47: #{tpu_custom_call.1} parent=1 // pred_check_branch
      %345 = sbr.rel (0) target = $region49
    $region48: #{tpu_custom_call.1} parent=1 // pred_region
      %346 = dma.done [#allocation4], 256
    $region49: #{tpu_custom_call.1} parent=1 // pred_fallthru
      _
    %347 = vsyncpa [#allocation3], 1
    %348 = vsyncpa [#allocation6], 1
    %349 = vsyncpa [#allocation4], 1

</llo_original>
